<compile_context>
chip_gen: v6e
topology: v6e:2x2x1
jax: 0.10.0
libtpu: 0.0.40
codegen_flags: <defaults>
</compile_context>

<pallas_src>
import functools
import math

import jax
import jax.numpy as jnp
from jax.experimental import pallas as pl
from jax.experimental.pallas import tpu as pltpu


# ----------------------------------------------------------------------------
# Fused kernel: one grid step == one image.
# ----------------------------------------------------------------------------
def _res2net_fused_kernel(x_ref, w1_ref, b1_ref, wbr_ref, bbr_ref, m_ref,
                          o_ref, *, width, scale, nums, H, W):
    HW = H * W
    x = x_ref[0]                                     # (Cin, HW) f32 (residual)

    # --- conv1 (1x1) + folded BN + ReLU: one MXU matmul, lane-dense N=HW ---
    out1 = jnp.dot(w1_ref[...], x.astype(jnp.bfloat16),
                   preferred_element_type=jnp.float32)   # (width*scale, HW)
    out1 = jnp.maximum(out1 + b1_ref[...], 0.0)

    masks = m_ref[...]                               # (9, 1, HW) bf16 0/1
    P = W + 1                                        # covers max |dy*W + dx|

    def conv3x3_bn_relu(sp, wmat, bvec):
        # sp: (width, HW) f32 | wmat: (width, 9*width) bf16 | bvec: (width, 1)
        sp_b = sp.astype(jnp.bfloat16)
        zpad = jnp.zeros((width, P), jnp.bfloat16)
        ext = jnp.concatenate([zpad, sp_b, zpad], axis=1)     # (width, HW+2P)
        taps = []
        for ky in range(3):
            for kx in range(3):
                dy, dx = ky - 1, kx - 1
                d = dy * W + dx
                sl = jax.lax.slice_in_dim(ext, P + d, P + d + HW, axis=1)
                taps.append(sl * masks[ky * 3 + kx])          # zero the halo
        col = jnp.concatenate(taps, axis=0)                   # (9*width, HW)
        y = jnp.dot(wmat, col, preferred_element_type=jnp.float32)
        return jnp.maximum(y + bvec, 0.0)                     # (width, HW)

    # --- hierarchical Res2Net branches (sequential by construction) ---
    pieces = []
    sp = None
    for i in range(nums):
        spx_i = out1[i * width:(i + 1) * width, :]
        sp = spx_i if i == 0 else sp + spx_i
        sp = conv3x3_bn_relu(sp, wbr_ref[i], bbr_ref[i])
        pieces.append(sp)
    if scale != 1:
        pieces.append(out1[nums * width:(nums + 1) * width, :])
    out = jnp.concatenate(pieces, axis=0)                     # (width*scale, HW)

    # TODO(synk): ESA_blcok not defined in the reference source; stand-in
    # spatial sigmoid gate from the residual applied to `out`.
    att = jax.nn.sigmoid(jnp.mean(x, axis=0, keepdims=True))  # (1, HW)
    o_ref[0] = (out * att).astype(o_ref.dtype)


# ----------------------------------------------------------------------------
# Parameter construction (eval-mode BN folded to scale/bias).
# ----------------------------------------------------------------------------
def fold_bn(gamma, beta, running_mean, running_var, eps=1e-5):
    s = gamma / jnp.sqrt(running_var + eps)
    b = beta - running_mean * s
    return s, b


def init_params(key, in_channels, baseWidth, init_feature, scale):
    width = int(math.floor(in_channels * (baseWidth / init_feature)))
    nums = 1 if scale == 1 else scale - 1
    keys = jax.random.split(key, 2 + 2 * nums)
    cs = width * scale

    p = {}
    # conv1: torch weight (cs, in_channels, 1, 1) -> stored as (cs, in_channels)
    p["conv1_w"] = 0.1 * jax.random.normal(keys[0], (cs, in_channels),
                                           jnp.float32)
    g1 = 1.0 + 0.05 * jax.random.normal(keys[1], (cs,), jnp.float32)
    b1 = 0.05 * jnp.arange(cs, dtype=jnp.float32)
    p["bn1_scale"], p["bn1_bias"] = fold_bn(g1, b1, jnp.zeros(cs), jnp.ones(cs))

    p["convs_w"], p["bns_scale"], p["bns_bias"] = [], [], []
    for i in range(nums):
        w = 0.1 * jax.random.normal(keys[2 + 2 * i], (width, width, 3, 3),
                                    jnp.float32)                 # OIHW
        g = 1.0 + 0.05 * jax.random.normal(keys[3 + 2 * i], (width,),
                                           jnp.float32)
        b = 0.02 * jnp.arange(width, dtype=jnp.float32)
        s, bb = fold_bn(g, b, jnp.zeros(width), jnp.ones(width))
        p["convs_w"].append(w)
        p["bns_scale"].append(s)
        p["bns_bias"].append(bb)

    p["width"], p["scale"], p["nums"] = width, scale, nums
    return p


def prepare_kernel_params(params, H, W):
    """Fold BN into weights, reorder 3x3 weights for im2col, build tap masks."""
    width, nums = params["width"], params["nums"]
    HW = H * W

    w1 = (params["bn1_scale"][:, None] * params["conv1_w"]).astype(jnp.bfloat16)
    b1 = params["bn1_bias"].reshape(-1, 1).astype(jnp.float32)

    wbr, bbr = [], []
    for i in range(nums):
        # OIHW (co, ci, ky, kx) -> (co, ky, kx, ci) -> (co, 9*width)
        wm = params["convs_w"][i].transpose(0, 2, 3, 1).reshape(width, 9 * width)
        wbr.append((params["bns_scale"][i][:, None] * wm).astype(jnp.bfloat16))
        bbr.append(params["bns_bias"][i].reshape(-1, 1).astype(jnp.float32))
    wbr = jnp.stack(wbr, axis=0)                 # (nums, width, 9*width) bf16
    bbr = jnp.stack(bbr, axis=0)                 # (nums, width, 1)       f32

    # 3x3 tap validity masks over the flattened H*W lane axis.
    hh, ww = jnp.meshgrid(jnp.arange(H), jnp.arange(W), indexing="ij")
    hh = hh.reshape(1, HW)
    ww = ww.reshape(1, HW)
    masks = []
    for ky in range(3):
        for kx in range(3):
            dy, dx = ky - 1, kx - 1
            valid = ((hh + dy >= 0) & (hh + dy < H) &
                     (ww + dx >= 0) & (ww + dx < W))
            masks.append(valid.astype(jnp.bfloat16))
    masks = jnp.stack(masks, axis=0)             # (9, 1, HW) bf16

    return {"w1": w1, "b1": b1, "wbr": wbr, "bbr": bbr, "masks": masks}


# ----------------------------------------------------------------------------
# Forward pass (mirrors Res2net_backbone.forward), single pallas_call.
# ----------------------------------------------------------------------------
def res2net_backbone_forward(x_nchw, params, kparams):
    width, scale, nums = params["width"], params["scale"], params["nums"]
    N, Cin, H, W = x_nchw.shape
    HW = H * W
    Cs = width * scale

    x_flat = x_nchw.reshape(N, Cin, HW).astype(jnp.float32)   # free reshape

    kernel = functools.partial(_res2net_fused_kernel, width=width, scale=scale,
                               nums=nums, H=H, W=W)

    out_flat = pl.pallas_call(
        kernel,
        out_shape=jax.ShapeDtypeStruct((N, Cs, HW), jnp.float32),
        grid_spec=pltpu.PrefetchScalarGridSpec(
            num_scalar_prefetch=0,
            grid=(N,),
            in_specs=[
                pl.BlockSpec((1, Cin, HW), lambda n: (n, 0, 0)),      # x
                pl.BlockSpec((Cs, Cin), lambda n: (0, 0)),            # w1
                pl.BlockSpec((Cs, 1), lambda n: (0, 0)),              # b1
                pl.BlockSpec((nums, width, 9 * width),
                             lambda n: (0, 0, 0)),                    # branch W
                pl.BlockSpec((nums, width, 1), lambda n: (0, 0, 0)),  # branch b
                pl.BlockSpec((9, 1, HW), lambda n: (0, 0, 0)),        # masks
            ],
            out_specs=pl.BlockSpec((1, Cs, HW), lambda n: (n, 0, 0)),
        ),
        compiler_params=pltpu.CompilerParams(
            dimension_semantics=("parallel",),     # megacore on v7x
            vmem_limit_bytes=32 * 1024 * 1024,
        ),
    )(x_flat, kparams["w1"], kparams["b1"], kparams["wbr"], kparams["bbr"],
      kparams["masks"])

    return out_flat.reshape(N, Cs, H, W)                      # NCHW, free


# ----------------------------------------------------------------------------
# Pure-JAX reference (f32) for correctness checking.
# ----------------------------------------------------------------------------
def reference_forward(x_nchw, params):
    width, scale, nums = params["width"], params["scale"], params["nums"]
    residual = x_nchw
    out = jnp.einsum("oc,nchw->nohw", params["conv1_w"], x_nchw,
                     precision="highest")
    out = (out * params["bn1_scale"][None, :, None, None]
           + params["bn1_bias"][None, :, None, None])
    out = jnp.maximum(out, 0.0)
    spx = [out[:, i * width:(i + 1) * width] for i in range(scale)]
    pieces = []
    sp = None
    for i in range(nums):
        sp = spx[i] if i == 0 else sp + spx[i]
        sp = jax.lax.conv_general_dilated(
            sp, params["convs_w"][i], window_strides=(1, 1), padding="SAME",
            dimension_numbers=("NCHW", "OIHW", "NCHW"),
            precision=jax.lax.Precision.HIGHEST)
        sp = (sp * params["bns_scale"][i][None, :, None, None]
              + params["bns_bias"][i][None, :, None, None])
        sp = jnp.maximum(sp, 0.0)
        pieces.append(sp)
    if scale != 1:
        pieces.append(spx[nums])
    out = jnp.concatenate(pieces, axis=1)
    att = jax.nn.sigmoid(jnp.mean(residual, axis=1, keepdims=True))
    return out * att


if __name__ == "__main__":
    in_channels, baseWidth, init_feature, scale = 4, 8, 8, 3
    params = init_params(jax.random.PRNGKey(42), in_channels, baseWidth,
                         init_feature, scale)

    x = jax.random.normal(jax.random.PRNGKey(0), (2, in_channels, 16, 16),
                          jnp.float32)                          # NCHW

    kparams = prepare_kernel_params(params, 16, 16)
    y = res2net_backbone_forward(x, params, kparams)
    y = jax.block_until_ready(y)

    expected_c = params["width"] * params["scale"]
    assert y.shape == (2, expected_c, 16, 16), y.shape
    assert bool(jnp.all(jnp.isfinite(y)))

    # Correctness vs. pure-JAX f32 reference (kernel matmuls run in bf16).
    y_ref = reference_forward(x, params)
    max_err = float(jnp.max(jnp.abs(y - y_ref)))
    assert bool(jnp.allclose(y, y_ref, atol=5e-2, rtol=5e-2)), max_err

    print("KERNEL_OK")
</pallas_src>

<mosaic_0001>
module attributes {stable_mosaic.version = 11 : i64} {
  func.func @_res2net_fused_kernel(%arg0: i32, %arg1: memref<1x4x256xf32, #tpu.memory_space<vmem>>, %arg2: memref<12x4xbf16, #tpu.memory_space<vmem>>, %arg3: memref<12x1xf32, #tpu.memory_space<vmem>>, %arg4: memref<2x4x36xbf16, #tpu.memory_space<vmem>>, %arg5: memref<2x4x1xf32, #tpu.memory_space<vmem>>, %arg6: memref<9x1x256xbf16, #tpu.memory_space<vmem>>, %arg7: memref<1x12x256xf32, #tpu.memory_space<vmem>>) attributes {dimension_semantics = [#tpu.dimension_semantics<parallel>], iteration_bounds = array<i64: 2>, scalar_prefetch = 0 : i64, scratch_operands = 0 : i64, tpu.core_type = #tpu.core_type<tc>, window_params = [{transform_indices = @transform_0, window_bounds = array<i64: 1, 4, 256>}, {pipeline_mode = #tpu.pipeline_mode<synchronous>, transform_indices = @transform_1, window_bounds = array<i64: 12, 4>}, {pipeline_mode = #tpu.pipeline_mode<synchronous>, transform_indices = @transform_2, window_bounds = array<i64: 12, 1>}, {pipeline_mode = #tpu.pipeline_mode<synchronous>, transform_indices = @transform_3, window_bounds = array<i64: 2, 4, 36>}, {pipeline_mode = #tpu.pipeline_mode<synchronous>, transform_indices = @transform_4, window_bounds = array<i64: 2, 4, 1>}, {pipeline_mode = #tpu.pipeline_mode<synchronous>, transform_indices = @transform_5, window_bounds = array<i64: 9, 1, 256>}, {transform_indices = @transform_6, window_bounds = array<i64: 1, 12, 256>}]} {
    %c0 = arith.constant 0 : index
    %c0_0 = arith.constant 0 : index
    %c0_1 = arith.constant 0 : index
    %0 = vector.load %arg1[%c0, %c0_0, %c0_1] : memref<1x4x256xf32, #tpu.memory_space<vmem>>, vector<1x4x256xf32>
    %1 = vector.shape_cast %0 : vector<1x4x256xf32> to vector<4x256xf32>
    %c0_2 = arith.constant 0 : index
    %c0_3 = arith.constant 0 : index
    %2 = vector.load %arg2[%c0_2, %c0_3] : memref<12x4xbf16, #tpu.memory_space<vmem>>, vector<12x4xbf16>
    %3 = arith.truncf %1 : vector<4x256xf32> to vector<4x256xbf16>
    %cst = arith.constant dense<0.000000e+00> : vector<12x256xf32>
    %4 = tpu.matmul %2, %3, %cst {dimension_numbers = #tpu.dot_dimension_numbers<[1], [0], [0], [1], [0, 0, 1, 1], [], []>} : vector<12x4xbf16>, vector<4x256xbf16>, vector<12x256xf32> -> vector<12x256xf32>
    %c0_4 = arith.constant 0 : index
    %c0_5 = arith.constant 0 : index
    %5 = vector.load %arg3[%c0_4, %c0_5] : memref<12x1xf32, #tpu.memory_space<vmem>>, vector<12x1xf32>
    %6 = vector.broadcast %5 : vector<12x1xf32> to vector<12x256xf32>
    %7 = arith.addf %4, %6 : vector<12x256xf32>
    %cst_6 = arith.constant 0.000000e+00 : f32
    %8 = vector.broadcast %cst_6 : f32 to vector<12x256xf32>
    %9 = arith.maximumf %7, %8 : vector<12x256xf32>
    %c0_7 = arith.constant 0 : index
    %c0_8 = arith.constant 0 : index
    %c0_9 = arith.constant 0 : index
    %10 = vector.load %arg6[%c0_7, %c0_8, %c0_9] : memref<9x1x256xbf16, #tpu.memory_space<vmem>>, vector<9x1x256xbf16>
    %11 = vector.extract_strided_slice %9 {offsets = [0, 0], sizes = [4, 256], strides = [1, 1]} : vector<12x256xf32> to vector<4x256xf32>
    %c0_10 = arith.constant 0 : index
    %c0_11 = arith.constant 0 : index
    %c0_12 = arith.constant 0 : index
    %12 = vector.load %arg4[%c0_10, %c0_11, %c0_12] : memref<2x4x36xbf16, #tpu.memory_space<vmem>>, vector<1x4x36xbf16>
    %13 = vector.shape_cast %12 : vector<1x4x36xbf16> to vector<4x36xbf16>
    %c0_13 = arith.constant 0 : index
    %c0_14 = arith.constant 0 : index
    %c0_15 = arith.constant 0 : index
    %14 = vector.load %arg5[%c0_13, %c0_14, %c0_15] : memref<2x4x1xf32, #tpu.memory_space<vmem>>, vector<1x4x1xf32>
    %15 = vector.shape_cast %14 : vector<1x4x1xf32> to vector<4x1xf32>
    %16 = arith.truncf %11 : vector<4x256xf32> to vector<4x256xbf16>
    %cst_16 = arith.constant 0.000000e+00 : bf16
    %17 = vector.broadcast %cst_16 : bf16 to vector<4x17xbf16>
    %18 = tpu.concatenate %17, %16, %17 in 1 : vector<4x17xbf16>, vector<4x256xbf16>, vector<4x17xbf16> -> vector<4x290xbf16>
    %19 = vector.extract_strided_slice %18 {offsets = [0, 0], sizes = [4, 256], strides = [1, 1]} : vector<4x290xbf16> to vector<4x256xbf16>
    %20 = vector.extract_strided_slice %10 {offsets = [0, 0, 0], sizes = [1, 1, 256], strides = [1, 1, 1]} : vector<9x1x256xbf16> to vector<1x1x256xbf16>
    %21 = vector.shape_cast %20 : vector<1x1x256xbf16> to vector<1x256xbf16>
    %22 = vector.broadcast %21 : vector<1x256xbf16> to vector<4x256xbf16>
    %23 = arith.mulf %19, %22 : vector<4x256xbf16>
    %24 = vector.extract_strided_slice %18 {offsets = [0, 1], sizes = [4, 256], strides = [1, 1]} : vector<4x290xbf16> to vector<4x256xbf16>
    %25 = vector.extract_strided_slice %10 {offsets = [1, 0, 0], sizes = [1, 1, 256], strides = [1, 1, 1]} : vector<9x1x256xbf16> to vector<1x1x256xbf16>
    %26 = vector.shape_cast %25 : vector<1x1x256xbf16> to vector<1x256xbf16>
    %27 = vector.broadcast %26 : vector<1x256xbf16> to vector<4x256xbf16>
    %28 = arith.mulf %24, %27 : vector<4x256xbf16>
    %29 = vector.extract_strided_slice %18 {offsets = [0, 2], sizes = [4, 256], strides = [1, 1]} : vector<4x290xbf16> to vector<4x256xbf16>
    %30 = vector.extract_strided_slice %10 {offsets = [2, 0, 0], sizes = [1, 1, 256], strides = [1, 1, 1]} : vector<9x1x256xbf16> to vector<1x1x256xbf16>
    %31 = vector.shape_cast %30 : vector<1x1x256xbf16> to vector<1x256xbf16>
    %32 = vector.broadcast %31 : vector<1x256xbf16> to vector<4x256xbf16>
    %33 = arith.mulf %29, %32 : vector<4x256xbf16>
    %34 = vector.extract_strided_slice %18 {offsets = [0, 16], sizes = [4, 256], strides = [1, 1]} : vector<4x290xbf16> to vector<4x256xbf16>
    %35 = vector.extract_strided_slice %10 {offsets = [3, 0, 0], sizes = [1, 1, 256], strides = [1, 1, 1]} : vector<9x1x256xbf16> to vector<1x1x256xbf16>
    %36 = vector.shape_cast %35 : vector<1x1x256xbf16> to vector<1x256xbf16>
    %37 = vector.broadcast %36 : vector<1x256xbf16> to vector<4x256xbf16>
    %38 = arith.mulf %34, %37 : vector<4x256xbf16>
    %39 = vector.extract_strided_slice %18 {offsets = [0, 17], sizes = [4, 256], strides = [1, 1]} : vector<4x290xbf16> to vector<4x256xbf16>
    %40 = vector.extract_strided_slice %10 {offsets = [4, 0, 0], sizes = [1, 1, 256], strides = [1, 1, 1]} : vector<9x1x256xbf16> to vector<1x1x256xbf16>
    %41 = vector.shape_cast %40 : vector<1x1x256xbf16> to vector<1x256xbf16>
    %42 = vector.broadcast %41 : vector<1x256xbf16> to vector<4x256xbf16>
    %43 = arith.mulf %39, %42 : vector<4x256xbf16>
    %44 = vector.extract_strided_slice %18 {offsets = [0, 18], sizes = [4, 256], strides = [1, 1]} : vector<4x290xbf16> to vector<4x256xbf16>
    %45 = vector.extract_strided_slice %10 {offsets = [5, 0, 0], sizes = [1, 1, 256], strides = [1, 1, 1]} : vector<9x1x256xbf16> to vector<1x1x256xbf16>
    %46 = vector.shape_cast %45 : vector<1x1x256xbf16> to vector<1x256xbf16>
    %47 = vector.broadcast %46 : vector<1x256xbf16> to vector<4x256xbf16>
    %48 = arith.mulf %44, %47 : vector<4x256xbf16>
    %49 = vector.extract_strided_slice %18 {offsets = [0, 32], sizes = [4, 256], strides = [1, 1]} : vector<4x290xbf16> to vector<4x256xbf16>
    %50 = vector.extract_strided_slice %10 {offsets = [6, 0, 0], sizes = [1, 1, 256], strides = [1, 1, 1]} : vector<9x1x256xbf16> to vector<1x1x256xbf16>
    %51 = vector.shape_cast %50 : vector<1x1x256xbf16> to vector<1x256xbf16>
    %52 = vector.broadcast %51 : vector<1x256xbf16> to vector<4x256xbf16>
    %53 = arith.mulf %49, %52 : vector<4x256xbf16>
    %54 = vector.extract_strided_slice %18 {offsets = [0, 33], sizes = [4, 256], strides = [1, 1]} : vector<4x290xbf16> to vector<4x256xbf16>
    %55 = vector.extract_strided_slice %10 {offsets = [7, 0, 0], sizes = [1, 1, 256], strides = [1, 1, 1]} : vector<9x1x256xbf16> to vector<1x1x256xbf16>
    %56 = vector.shape_cast %55 : vector<1x1x256xbf16> to vector<1x256xbf16>
    %57 = vector.broadcast %56 : vector<1x256xbf16> to vector<4x256xbf16>
    %58 = arith.mulf %54, %57 : vector<4x256xbf16>
    %59 = vector.extract_strided_slice %18 {offsets = [0, 34], sizes = [4, 256], strides = [1, 1]} : vector<4x290xbf16> to vector<4x256xbf16>
    %60 = vector.extract_strided_slice %10 {offsets = [8, 0, 0], sizes = [1, 1, 256], strides = [1, 1, 1]} : vector<9x1x256xbf16> to vector<1x1x256xbf16>
    %61 = vector.shape_cast %60 : vector<1x1x256xbf16> to vector<1x256xbf16>
    %62 = vector.broadcast %61 : vector<1x256xbf16> to vector<4x256xbf16>
    %63 = arith.mulf %59, %62 : vector<4x256xbf16>
    %64 = tpu.concatenate %23, %28, %33, %38, %43, %48, %53, %58, %63 in 0 : vector<4x256xbf16>, vector<4x256xbf16>, vector<4x256xbf16>, vector<4x256xbf16>, vector<4x256xbf16>, vector<4x256xbf16>, vector<4x256xbf16>, vector<4x256xbf16>, vector<4x256xbf16> -> vector<36x256xbf16>
    %cst_17 = arith.constant dense<0.000000e+00> : vector<4x256xf32>
    %65 = tpu.matmul %13, %64, %cst_17 {dimension_numbers = #tpu.dot_dimension_numbers<[1], [0], [0], [1], [0, 0, 1, 1], [], []>} : vector<4x36xbf16>, vector<36x256xbf16>, vector<4x256xf32> -> vector<4x256xf32>
    %66 = vector.broadcast %15 : vector<4x1xf32> to vector<4x256xf32>
    %67 = arith.addf %65, %66 : vector<4x256xf32>
    %cst_18 = arith.constant 0.000000e+00 : f32
    %68 = vector.broadcast %cst_18 : f32 to vector<4x256xf32>
    %69 = arith.maximumf %67, %68 : vector<4x256xf32>
    %70 = vector.extract_strided_slice %9 {offsets = [4, 0], sizes = [4, 256], strides = [1, 1]} : vector<12x256xf32> to vector<4x256xf32>
    %71 = arith.addf %69, %70 : vector<4x256xf32>
    %c1 = arith.constant 1 : index
    %c0_19 = arith.constant 0 : index
    %c0_20 = arith.constant 0 : index
    %72 = vector.load %arg4[%c1, %c0_19, %c0_20] : memref<2x4x36xbf16, #tpu.memory_space<vmem>>, vector<1x4x36xbf16>
    %73 = vector.shape_cast %72 : vector<1x4x36xbf16> to vector<4x36xbf16>
    %c1_21 = arith.constant 1 : index
    %c0_22 = arith.constant 0 : index
    %c0_23 = arith.constant 0 : index
    %74 = vector.load %arg5[%c1_21, %c0_22, %c0_23] : memref<2x4x1xf32, #tpu.memory_space<vmem>>, vector<1x4x1xf32>
    %75 = vector.shape_cast %74 : vector<1x4x1xf32> to vector<4x1xf32>
    %76 = arith.truncf %71 : vector<4x256xf32> to vector<4x256xbf16>
    %cst_24 = arith.constant 0.000000e+00 : bf16
    %77 = vector.broadcast %cst_24 : bf16 to vector<4x17xbf16>
    %78 = tpu.concatenate %77, %76, %77 in 1 : vector<4x17xbf16>, vector<4x256xbf16>, vector<4x17xbf16> -> vector<4x290xbf16>
    %79 = vector.extract_strided_slice %78 {offsets = [0, 0], sizes = [4, 256], strides = [1, 1]} : vector<4x290xbf16> to vector<4x256xbf16>
    %80 = vector.extract_strided_slice %10 {offsets = [0, 0, 0], sizes = [1, 1, 256], strides = [1, 1, 1]} : vector<9x1x256xbf16> to vector<1x1x256xbf16>
    %81 = vector.shape_cast %80 : vector<1x1x256xbf16> to vector<1x256xbf16>
    %82 = vector.broadcast %81 : vector<1x256xbf16> to vector<4x256xbf16>
    %83 = arith.mulf %79, %82 : vector<4x256xbf16>
    %84 = vector.extract_strided_slice %78 {offsets = [0, 1], sizes = [4, 256], strides = [1, 1]} : vector<4x290xbf16> to vector<4x256xbf16>
    %85 = vector.extract_strided_slice %10 {offsets = [1, 0, 0], sizes = [1, 1, 256], strides = [1, 1, 1]} : vector<9x1x256xbf16> to vector<1x1x256xbf16>
    %86 = vector.shape_cast %85 : vector<1x1x256xbf16> to vector<1x256xbf16>
    %87 = vector.broadcast %86 : vector<1x256xbf16> to vector<4x256xbf16>
    %88 = arith.mulf %84, %87 : vector<4x256xbf16>
    %89 = vector.extract_strided_slice %78 {offsets = [0, 2], sizes = [4, 256], strides = [1, 1]} : vector<4x290xbf16> to vector<4x256xbf16>
    %90 = vector.extract_strided_slice %10 {offsets = [2, 0, 0], sizes = [1, 1, 256], strides = [1, 1, 1]} : vector<9x1x256xbf16> to vector<1x1x256xbf16>
    %91 = vector.shape_cast %90 : vector<1x1x256xbf16> to vector<1x256xbf16>
    %92 = vector.broadcast %91 : vector<1x256xbf16> to vector<4x256xbf16>
    %93 = arith.mulf %89, %92 : vector<4x256xbf16>
    %94 = vector.extract_strided_slice %78 {offsets = [0, 16], sizes = [4, 256], strides = [1, 1]} : vector<4x290xbf16> to vector<4x256xbf16>
    %95 = vector.extract_strided_slice %10 {offsets = [3, 0, 0], sizes = [1, 1, 256], strides = [1, 1, 1]} : vector<9x1x256xbf16> to vector<1x1x256xbf16>
    %96 = vector.shape_cast %95 : vector<1x1x256xbf16> to vector<1x256xbf16>
    %97 = vector.broadcast %96 : vector<1x256xbf16> to vector<4x256xbf16>
    %98 = arith.mulf %94, %97 : vector<4x256xbf16>
    %99 = vector.extract_strided_slice %78 {offsets = [0, 17], sizes = [4, 256], strides = [1, 1]} : vector<4x290xbf16> to vector<4x256xbf16>
    %100 = vector.extract_strided_slice %10 {offsets = [4, 0, 0], sizes = [1, 1, 256], strides = [1, 1, 1]} : vector<9x1x256xbf16> to vector<1x1x256xbf16>
    %101 = vector.shape_cast %100 : vector<1x1x256xbf16> to vector<1x256xbf16>
    %102 = vector.broadcast %101 : vector<1x256xbf16> to vector<4x256xbf16>
    %103 = arith.mulf %99, %102 : vector<4x256xbf16>
    %104 = vector.extract_strided_slice %78 {offsets = [0, 18], sizes = [4, 256], strides = [1, 1]} : vector<4x290xbf16> to vector<4x256xbf16>
    %105 = vector.extract_strided_slice %10 {offsets = [5, 0, 0], sizes = [1, 1, 256], strides = [1, 1, 1]} : vector<9x1x256xbf16> to vector<1x1x256xbf16>
    %106 = vector.shape_cast %105 : vector<1x1x256xbf16> to vector<1x256xbf16>
    %107 = vector.broadcast %106 : vector<1x256xbf16> to vector<4x256xbf16>
    %108 = arith.mulf %104, %107 : vector<4x256xbf16>
    %109 = vector.extract_strided_slice %78 {offsets = [0, 32], sizes = [4, 256], strides = [1, 1]} : vector<4x290xbf16> to vector<4x256xbf16>
    %110 = vector.extract_strided_slice %10 {offsets = [6, 0, 0], sizes = [1, 1, 256], strides = [1, 1, 1]} : vector<9x1x256xbf16> to vector<1x1x256xbf16>
    %111 = vector.shape_cast %110 : vector<1x1x256xbf16> to vector<1x256xbf16>
    %112 = vector.broadcast %111 : vector<1x256xbf16> to vector<4x256xbf16>
    %113 = arith.mulf %109, %112 : vector<4x256xbf16>
    %114 = vector.extract_strided_slice %78 {offsets = [0, 33], sizes = [4, 256], strides = [1, 1]} : vector<4x290xbf16> to vector<4x256xbf16>
    %115 = vector.extract_strided_slice %10 {offsets = [7, 0, 0], sizes = [1, 1, 256], strides = [1, 1, 1]} : vector<9x1x256xbf16> to vector<1x1x256xbf16>
    %116 = vector.shape_cast %115 : vector<1x1x256xbf16> to vector<1x256xbf16>
    %117 = vector.broadcast %116 : vector<1x256xbf16> to vector<4x256xbf16>
    %118 = arith.mulf %114, %117 : vector<4x256xbf16>
    %119 = vector.extract_strided_slice %78 {offsets = [0, 34], sizes = [4, 256], strides = [1, 1]} : vector<4x290xbf16> to vector<4x256xbf16>
    %120 = vector.extract_strided_slice %10 {offsets = [8, 0, 0], sizes = [1, 1, 256], strides = [1, 1, 1]} : vector<9x1x256xbf16> to vector<1x1x256xbf16>
    %121 = vector.shape_cast %120 : vector<1x1x256xbf16> to vector<1x256xbf16>
    %122 = vector.broadcast %121 : vector<1x256xbf16> to vector<4x256xbf16>
    %123 = arith.mulf %119, %122 : vector<4x256xbf16>
    %124 = tpu.concatenate %83, %88, %93, %98, %103, %108, %113, %118, %123 in 0 : vector<4x256xbf16>, vector<4x256xbf16>, vector<4x256xbf16>, vector<4x256xbf16>, vector<4x256xbf16>, vector<4x256xbf16>, vector<4x256xbf16>, vector<4x256xbf16>, vector<4x256xbf16> -> vector<36x256xbf16>
    %cst_25 = arith.constant dense<0.000000e+00> : vector<4x256xf32>
    %125 = tpu.matmul %73, %124, %cst_25 {dimension_numbers = #tpu.dot_dimension_numbers<[1], [0], [0], [1], [0, 0, 1, 1], [], []>} : vector<4x36xbf16>, vector<36x256xbf16>, vector<4x256xf32> -> vector<4x256xf32>
    %126 = vector.broadcast %75 : vector<4x1xf32> to vector<4x256xf32>
    %127 = arith.addf %125, %126 : vector<4x256xf32>
    %cst_26 = arith.constant 0.000000e+00 : f32
    %128 = vector.broadcast %cst_26 : f32 to vector<4x256xf32>
    %129 = arith.maximumf %127, %128 : vector<4x256xf32>
    %130 = vector.extract_strided_slice %9 {offsets = [8, 0], sizes = [4, 256], strides = [1, 1]} : vector<12x256xf32> to vector<4x256xf32>
    %131 = tpu.concatenate %69, %129, %130 in 0 : vector<4x256xf32>, vector<4x256xf32>, vector<4x256xf32> -> vector<12x256xf32>
    %cst_27 = arith.constant dense<0.000000e+00> : vector<256xf32>
    %132 = vector.multi_reduction <add>, %1, %cst_27 [0] : vector<4x256xf32> to vector<256xf32>
    %133 = vector.shape_cast %132 : vector<256xf32> to vector<1x256xf32>
    %cst_28 = arith.constant 4.000000e+00 : f32
    %134 = vector.broadcast %cst_28 : f32 to vector<1x256xf32>
    %135 = arith.divf %133, %134 : vector<1x256xf32>
    %136 = arith.negf %135 : vector<1x256xf32>
    %137 = math.exp %136 : vector<1x256xf32>
    %cst_29 = arith.constant 1.000000e+00 : f32
    %138 = vector.broadcast %cst_29 : f32 to vector<1x256xf32>
    %139 = arith.addf %138, %137 : vector<1x256xf32>
    %140 = arith.divf %138, %139 : vector<1x256xf32>
    %141 = vector.broadcast %140 : vector<1x256xf32> to vector<12x256xf32>
    %142 = arith.mulf %131, %141 : vector<12x256xf32>
    %c0_30 = arith.constant 0 : index
    %c0_31 = arith.constant 0 : index
    %c0_32 = arith.constant 0 : index
    %143 = vector.load %arg7[%c0_30, %c0_31, %c0_32] : memref<1x12x256xf32, #tpu.memory_space<vmem>>, vector<1x12x256xf32>
    %144 = vector.shape_cast %143 : vector<1x12x256xf32> to vector<12x256xf32>
    %145 = vector.shape_cast %142 : vector<12x256xf32> to vector<1x12x256xf32>
    tpu.vector_store %arg7[%c0_30, %c0_31, %c0_32], %145 {strides = array<i32>} : memref<1x12x256xf32, #tpu.memory_space<vmem>>, vector<1x12x256xf32>,
    return
  }
  func.func @transform_0(%arg0: i32) -> (i32, i32, i32) {
    %c0_i32 = arith.constant 0 : i32
    %c0_i32_0 = arith.constant 0 : i32
    %c0_i32_1 = arith.constant 0 : i32
    return %arg0, %c0_i32, %c0_i32_0 : i32, i32, i32
  }
  func.func @transform_1(%arg0: i32) -> (i32, i32) {
    %c0_i32 = arith.constant 0 : i32
    %c0_i32_0 = arith.constant 0 : i32
    %c0_i32_1 = arith.constant 0 : i32
    return %c0_i32, %c0_i32_0 : i32, i32
  }
  func.func @transform_2(%arg0: i32) -> (i32, i32) {
    %c0_i32 = arith.constant 0 : i32
    %c0_i32_0 = arith.constant 0 : i32
    %c0_i32_1 = arith.constant 0 : i32
    return %c0_i32, %c0_i32_0 : i32, i32
  }
  func.func @transform_3(%arg0: i32) -> (i32, i32, i32) {
    %c0_i32 = arith.constant 0 : i32
    %c0_i32_0 = arith.constant 0 : i32
    %c0_i32_1 = arith.constant 0 : i32
    %c0_i32_2 = arith.constant 0 : i32
    return %c0_i32, %c0_i32_0, %c0_i32_1 : i32, i32, i32
  }
  func.func @transform_4(%arg0: i32) -> (i32, i32, i32) {
    %c0_i32 = arith.constant 0 : i32
    %c0_i32_0 = arith.constant 0 : i32
    %c0_i32_1 = arith.constant 0 : i32
    %c0_i32_2 = arith.constant 0 : i32
    return %c0_i32, %c0_i32_0, %c0_i32_1 : i32, i32, i32
  }
  func.func @transform_5(%arg0: i32) -> (i32, i32, i32) {
    %c0_i32 = arith.constant 0 : i32
    %c0_i32_0 = arith.constant 0 : i32
    %c0_i32_1 = arith.constant 0 : i32
    %c0_i32_2 = arith.constant 0 : i32
    return %c0_i32, %c0_i32_0, %c0_i32_1 : i32, i32, i32
  }
  func.func @transform_6(%arg0: i32) -> (i32, i32, i32) {
    %c0_i32 = arith.constant 0 : i32
    %c0_i32_0 = arith.constant 0 : i32
    %c0_i32_1 = arith.constant 0 : i32
    return %arg0, %c0_i32, %c0_i32_0 : i32, i32, i32
  }
}

</mosaic_0001>

<llo_original>
// kernel: tpu_custom_call.1
$region0: #{tpu_custom_call.1}
  #allocation0 [shape = 'u32[]', space=smem, size = 0x4, offset = 0x4, fixed_abs, tag = 'smem constant byte address 0x4 - core index']
  #allocation1 [shape = 'u32[144,128]{1,0:T(1,128)}', space=vmem, size = 0x12000, scoped, tag = 'internal scratch']
  %s0 = inlined_call_operand.vmem [shape: f32[2,4,256], index: 0, kind: input, shape index: {}]
  %s1 = inlined_call_operand.vmem [shape: bf16[12,4], index: 1, kind: input, shape index: {}]
  %s2 = inlined_call_operand.vmem [shape: f32[12,1], index: 2, kind: input, shape index: {}]
  %s3 = inlined_call_operand.vmem [shape: bf16[2,4,36], index: 3, kind: input, shape index: {}]
  %s4 = inlined_call_operand.vmem [shape: f32[2,4,1], index: 4, kind: input, shape index: {}]
  %s5 = inlined_call_operand.vmem [shape: bf16[9,1,256], index: 5, kind: input, shape index: {}]
  %s6 = inlined_call_operand.vmem [shape: f32[2,12,256], index: 6, kind: output, shape index: {}]
  %s7 = sld [smem:[#allocation0]]
  $region57: #{tpu_custom_call.1} parent=0
    _
  %s9 = ssub.s32 1, %s7
  %s10 = scalar_select 0, %s9, %s7
  loop: start=0, step=1, limit=4
  $region2: #{tpu_custom_call.1} parent=0 // loop_pre_header
    _
  $region3: #{tpu_custom_call.1} parent=0 // loop_header
    %s12 = sphi 0, %s16
    %p13 = scmp.ge.s32.totalorder %s12, 4
    %s22 = sphi 0, %s24
    %s25 = sphi 0, %s22
    %s26 = sphi 0, %s25
    %s42 = sphi 0, %s26
    %s46 = sphi 0, %s46
    %s48 = sphi 0, %s46
    %s49 = sphi 0, %s48
    %s63 = sphi 0, %s49
    %s67 = sphi 0, %s67
    %s69 = sphi 0, %s67
    %s70 = sphi 0, %s69
    %s84 = sphi 0, %s70
    %s88 = sphi 0, %s88
    %s90 = sphi 0, %s88
    %s91 = sphi 0, %s90
    %s105 = sphi 0, %s91
    %s109 = sphi 0, %s109
    %s111 = sphi 0, %s109
    %s112 = sphi 0, %s111
    %s126 = sphi 0, %s112
    %s130 = sphi 0, %s130
    %s132 = sphi 0, %s130
    %s133 = sphi 0, %s132
    %s147 = sphi 0, %s133
    %s153 = sphi 0, %s155
    %s156 = sphi 0, %s153
    %s157 = sphi 0, %s156
    %s173 = sphi 0, %s157
  $region4: #{tpu_custom_call.1} parent=0 // loop_header_branch
    %15 = sbr.rel (%p13) target = $region8
  $region5: #{tpu_custom_call.1} parent=0 // loop_body
    %s17 = ssub.s32 %s12, 1
    %s18 = ssub.s32 %s12, 2
    %s19 = sadd.s32 %s12, 1
    %s20 = ssub.s32 %s12, %s19
    %p21 = scmp.eq.s32.totalorder %s20, 0
    %s23 = sadd.s32 %s22, 1
    %s24 = scalar_select %p21, %s22, %s23
    %p27 = pneg %p21
    %p28 = scmp.eq.s32.totalorder %s12, 1
    %p29 = por %p27, %p28
    %p30 = scmp.ne.s32.totalorder %s22, %s25
    %p31 = scmp.eq.s32.totalorder %s12, 0
    %p32 = por %p30, %p31
    %p33 = scmp.ne.s32.totalorder %s22, %s25
    %p34 = scmp.eq.s32.totalorder %s17, 1
    %p35 = por %p33, %p34
    %p36 = scmp.ne.s32.totalorder %s25, %s26
    %p37 = scmp.eq.s32.totalorder %s17, 0
    %p38 = por %p36, %p37
    %p39 = scmp.ne.s32.totalorder %s25, %s26
    %p40 = scmp.eq.s32.totalorder %s18, 1
    %p41 = por %p39, %p40
    %p43 = scmp.ne.s32.totalorder %s26, %s42
    %p44 = scmp.eq.s32.totalorder %s18, 0
    %p45 = por %p43, %p44
    %s47 = sadd.s32 %s46, 1
    %p50 = scmp.eq.s32.totalorder %s12, 1
    %p51 = scmp.ne.s32.totalorder %s46, %s48
    %p52 = scmp.eq.s32.totalorder %s12, 0
    %p53 = por %p51, %p52
    %p54 = scmp.ne.s32.totalorder %s46, %s48
    %p55 = scmp.eq.s32.totalorder %s17, 1
    %p56 = por %p54, %p55
    %p57 = scmp.ne.s32.totalorder %s48, %s49
    %p58 = scmp.eq.s32.totalorder %s17, 0
    %p59 = por %p57, %p58
    %p60 = scmp.ne.s32.totalorder %s48, %s49
    %p61 = scmp.eq.s32.totalorder %s18, 1
    %p62 = por %p60, %p61
    %p64 = scmp.ne.s32.totalorder %s49, %s63
    %p65 = scmp.eq.s32.totalorder %s18, 0
    %p66 = por %p64, %p65
    %s68 = sadd.s32 %s67, 1
    %p71 = scmp.eq.s32.totalorder %s12, 1
    %p72 = scmp.ne.s32.totalorder %s67, %s69
    %p73 = scmp.eq.s32.totalorder %s12, 0
    %p74 = por %p72, %p73
    %p75 = scmp.ne.s32.totalorder %s67, %s69
    %p76 = scmp.eq.s32.totalorder %s17, 1
    %p77 = por %p75, %p76
    %p78 = scmp.ne.s32.totalorder %s69, %s70
    %p79 = scmp.eq.s32.totalorder %s17, 0
    %p80 = por %p78, %p79
    %p81 = scmp.ne.s32.totalorder %s69, %s70
    %p82 = scmp.eq.s32.totalorder %s18, 1
    %p83 = por %p81, %p82
    %p85 = scmp.ne.s32.totalorder %s70, %s84
    %p86 = scmp.eq.s32.totalorder %s18, 0
    %p87 = por %p85, %p86
    %s89 = sadd.s32 %s88, 1
    %p92 = scmp.eq.s32.totalorder %s12, 1
    %p93 = scmp.ne.s32.totalorder %s88, %s90
    %p94 = scmp.eq.s32.totalorder %s12, 0
    %p95 = por %p93, %p94
    %p96 = scmp.ne.s32.totalorder %s88, %s90
    %p97 = scmp.eq.s32.totalorder %s17, 1
    %p98 = por %p96, %p97
    %p99 = scmp.ne.s32.totalorder %s90, %s91
    %p100 = scmp.eq.s32.totalorder %s17, 0
    %p101 = por %p99, %p100
    %p102 = scmp.ne.s32.totalorder %s90, %s91
    %p103 = scmp.eq.s32.totalorder %s18, 1
    %p104 = por %p102, %p103
    %p106 = scmp.ne.s32.totalorder %s91, %s105
    %p107 = scmp.eq.s32.totalorder %s18, 0
    %p108 = por %p106, %p107
    %s110 = sadd.s32 %s109, 1
    %p113 = scmp.eq.s32.totalorder %s12, 1
    %p114 = scmp.ne.s32.totalorder %s109, %s111
    %p115 = scmp.eq.s32.totalorder %s12, 0
    %p116 = por %p114, %p115
    %p117 = scmp.ne.s32.totalorder %s109, %s111
    %p118 = scmp.eq.s32.totalorder %s17, 1
    %p119 = por %p117, %p118
    %p120 = scmp.ne.s32.totalorder %s111, %s112
    %p121 = scmp.eq.s32.totalorder %s17, 0
    %p122 = por %p120, %p121
    %p123 = scmp.ne.s32.totalorder %s111, %s112
    %p124 = scmp.eq.s32.totalorder %s18, 1
    %p125 = por %p123, %p124
    %p127 = scmp.ne.s32.totalorder %s112, %s126
    %p128 = scmp.eq.s32.totalorder %s18, 0
    %p129 = por %p127, %p128
    %s131 = sadd.s32 %s130, 1
    %p134 = scmp.eq.s32.totalorder %s12, 1
    %p135 = scmp.ne.s32.totalorder %s130, %s132
    %p136 = scmp.eq.s32.totalorder %s12, 0
    %p137 = por %p135, %p136
    %p138 = scmp.ne.s32.totalorder %s130, %s132
    %p139 = scmp.eq.s32.totalorder %s17, 1
    %p140 = por %p138, %p139
    %p141 = scmp.ne.s32.totalorder %s132, %s133
    %p142 = scmp.eq.s32.totalorder %s17, 0
    %p143 = por %p141, %p142
    %p144 = scmp.ne.s32.totalorder %s132, %s133
    %p145 = scmp.eq.s32.totalorder %s18, 1
    %p146 = por %p144, %p145
    %p148 = scmp.ne.s32.totalorder %s133, %s147
    %p149 = scmp.eq.s32.totalorder %s18, 0
    %p150 = por %p148, %p149
    %s151 = ssub.s32 %s12, %s19
    %p152 = scmp.eq.s32.totalorder %s151, 0
    %s154 = sadd.s32 %s153, 1
    %s155 = scalar_select %p152, %s153, %s154
    %p158 = pneg %p152
    %p159 = scmp.eq.s32.totalorder %s12, 1
    %p160 = por %p158, %p159
    %p161 = scmp.ne.s32.totalorder %s153, %s156
    %p162 = scmp.eq.s32.totalorder %s12, 0
    %p163 = por %p161, %p162
    %p164 = scmp.ne.s32.totalorder %s153, %s156
    %p165 = scmp.eq.s32.totalorder %s17, 1
    %p166 = por %p164, %p165
    %p167 = scmp.ne.s32.totalorder %s156, %s157
    %p168 = scmp.eq.s32.totalorder %s17, 0
    %p169 = por %p167, %p168
    %p170 = scmp.ne.s32.totalorder %s156, %s157
    %p171 = scmp.eq.s32.totalorder %s18, 1
    %p172 = por %p170, %p171
    %p174 = scmp.ne.s32.totalorder %s157, %s173
    %p175 = scmp.eq.s32.totalorder %s18, 0
    %p176 = por %p174, %p175
    %p177 = scmp.le.s32.totalorder 1, %s12
    %p178 = scmp.lt.s32.totalorder %s12, 3
    %p179 = pnand %p177, %p178
    %p180 = pneg %p179
    // Predicated region
    $region9: #{tpu_custom_call.1} parent=5 // pred_check
      _
    $region10: #{tpu_custom_call.1} parent=5 // pred_check_branch
      %182 = sbr.rel (%p179) target = $region12
    $region11: #{tpu_custom_call.1} parent=5 // pred_region
      %s183 = ssub.s32 %s12, 1
      // Predicated region
      $region13: #{tpu_custom_call.1} parent=11 // pred_check
        %p184 = pneg %p59
      $region14: #{tpu_custom_call.1} parent=11 // pred_check_branch
        %186 = sbr.rel (%p184) target = $region16
      $region15: #{tpu_custom_call.1} parent=11 // pred_region
        _
      $region16: #{tpu_custom_call.1} parent=11 // pred_fallthru
        _
      // Predicated region
      $region17: #{tpu_custom_call.1} parent=11 // pred_check
        %p187 = pneg %p80
      $region18: #{tpu_custom_call.1} parent=11 // pred_check_branch
        %189 = sbr.rel (%p187) target = $region20
      $region19: #{tpu_custom_call.1} parent=11 // pred_region
        _
      $region20: #{tpu_custom_call.1} parent=11 // pred_fallthru
        _
      // Predicated region
      $region21: #{tpu_custom_call.1} parent=11 // pred_check
        %p190 = pneg %p101
      $region22: #{tpu_custom_call.1} parent=11 // pred_check_branch
        %192 = sbr.rel (%p190) target = $region24
      $region23: #{tpu_custom_call.1} parent=11 // pred_region
        _
      $region24: #{tpu_custom_call.1} parent=11 // pred_fallthru
        _
      // Predicated region
      $region25: #{tpu_custom_call.1} parent=11 // pred_check
        %p193 = pneg %p122
      $region26: #{tpu_custom_call.1} parent=11 // pred_check_branch
        %195 = sbr.rel (%p193) target = $region28
      $region27: #{tpu_custom_call.1} parent=11 // pred_region
        _
      $region28: #{tpu_custom_call.1} parent=11 // pred_fallthru
        _
      // Predicated region
      $region29: #{tpu_custom_call.1} parent=11 // pred_check
        %p196 = pneg %p143
      $region30: #{tpu_custom_call.1} parent=11 // pred_check_branch
        %198 = sbr.rel (%p196) target = $region32
      $region31: #{tpu_custom_call.1} parent=11 // pred_region
        _
      $region32: #{tpu_custom_call.1} parent=11 // pred_fallthru
        _
    $region12: #{tpu_custom_call.1} parent=5 // pred_fallthru
      _
    %p199 = scmp.lt.s32.totalorder %s12, 2
    // Predicated region
    $region33: #{tpu_custom_call.1} parent=5 // pred_check
      %p200 = pneg %p199
    $region34: #{tpu_custom_call.1} parent=5 // pred_check_branch
      %202 = sbr.rel (%p200) target = $region36
    $region35: #{tpu_custom_call.1} parent=5 // pred_region
      // Predicated region
      $region37: #{tpu_custom_call.1} parent=35 // pred_check
        %p203 = pneg %p32
      $region38: #{tpu_custom_call.1} parent=35 // pred_check_branch
        %205 = sbr.rel (%p203) target = $region40
      $region39: #{tpu_custom_call.1} parent=35 // pred_region
        %p206 = scmp.lt.s32.totalorder %s12, 1
        %s207 = scalar_select %p206, %s12, 1
        %s208 = smul.addr %s207, 2
        %s209 = smul.addr %s208, 4
        %s210 = scalar_lea.vmem %s0, %s209
      $region40: #{tpu_custom_call.1} parent=35 // pred_fallthru
        _
    $region36: #{tpu_custom_call.1} parent=5 // pred_fallthru
      _
    %p211 = scmp.le.s32.totalorder 1, %s12
    %p212 = scmp.lt.s32.totalorder %s12, 3
    %p213 = pnand %p211, %p212
    %p214 = pneg %p213
    // Predicated region
    $region41: #{tpu_custom_call.1} parent=5 // pred_check
      _
    $region42: #{tpu_custom_call.1} parent=5 // pred_check_branch
      %216 = sbr.rel (%p213) target = $region44
    $region43: #{tpu_custom_call.1} parent=5 // pred_region
      %s217 = ssub.s32 %s12, 1
      %p218 = scmp.lt.s32.totalorder %s17, 1
      %s219 = scalar_select %p218, %s17, 1
      %s220 = smul.addr %s219, 2
      %s221 = smul.addr %s220, 4
      %s222 = scalar_lea.vmem %s0, %s221
      %p223 = pneg %p38
      %p224 = pneg %p35
      %p225 = pneg %p59
      %p226 = pneg %p56
      %p227 = pneg %p80
      %p228 = pneg %p77
      %p229 = pneg %p101
      %p230 = pneg %p98
      %p231 = pneg %p122
      %p232 = pneg %p119
      %p233 = pneg %p143
      %p234 = pneg %p140
      %p235 = pneg %p169
      %p236 = pneg %p166
      %p237 = scmp.lt.s32.totalorder %s17, 1
      %s238 = scalar_select %p237, %s17, 1
      %s239 = smul.addr %s238, 4
      %s240 = smul.addr %s239, 8
      %s241 = scalar_lea.vmem %s6, %s240
      %p242 = scmp.lt.s32.totalorder %s17, 1
      %s243 = scalar_select %p242, %s17, 1
      %s244 = smul.addr %s243, 2
      %s245 = smul.addr %s244, 4
      %s246 = scalar_lea.vmem %s0, %s245
      %p247 = scmp.lt.s32.totalorder %s17, 1
      %s248 = scalar_select %p247, %s17, 1
      %s249 = smul.addr %s248, 4
      %s250 = smul.addr %s249, 8
      %s251 = scalar_lea.vmem %s6, %s250
      %v253 = vld [vmem:[%s246] sm:$0xff]
      %v254 = vld [vmem:[%s1] sm:$0xf]
      %v255 = vld [vmem:[%s1 + $0x4] sm:$0x3]
      %v257 = vcombine.high %v253, %v253
      %v259 = vpack.c.bf16 %v253, %v253
      %v260 = vpack.c.bf16 %v257, %v257
      %v261 = vld [vmem:[%s2] sm:$0xff]
      %v262 = vld [vmem:[%s2 + $0x8] sm:$0xf]
      %264 = vset.pattern.permute.xlu0 0
      %265 = vperm.xlu0 %264, %v261
      %v266 = vpop.permute.xlu0 %265
      %269 = vset.pattern.permute.xlu0 0
      %270 = vperm.xlu0 %269, %v262
      %v271 = vpop.permute.xlu0 %270
      %v275 = vunpack.c.l.b16 %v254
      %v276 = vunpack.c.l.b16 %v255
      %v277 = vpack.c.b16 %v276, %v275
      %vm278 = vcmask 31744
      %v280 = vsel %vm278, %v277, 0
      %vm282 = vcmask 1041408
      %v284 = vsel %vm282, %v259, 0
      %v287 = vsel %vm282, %v260, 0
      %289 = vmatprep.subr.bf16.mxu0 0
      %290 = vmatpush1.bf16.msra.mxu0 0
      %291 = vmatprep.subr.bf16.mxu0 0
      %292 = vmatpush1.bf16.msra.mxu0 0
      %293 = vmatprep.subr.bf16.mxu0 0
      %294 = vmatpush1.bf16.msra.mxu0 0
      %295 = vmatprep.subr.bf16.mxu0 0
      %296 = vmatpush1.bf16.msra.mxu0 0
      %297 = vmatprep.subr.bf16.mxu0 0
      %298 = vmatpush1.bf16.msra.mxu0 0
      %299 = vmatprep.subr.bf16.mxu0 0
      %300 = vmatpush1.bf16.msra.mxu0 0
      %301 = vmatprep.subr.bf16.mxu0 0
      %302 = vmatpush1.bf16.msra.mxu0 0
      %303 = vmatprep.subr.bf16.mxu0 %v287
      %304 = vmatpush1.bf16.msra.mxu0 %v284
      %305 = vmatprep.subr.bf16.mxu0 0
      %306 = vmatpush2.bf16.msra.mxu0 0
      %307 = vmatprep.subr.bf16.mxu0 0
      %308 = vmatpush2.bf16.msra.mxu0 0
      %309 = vmatprep.subr.bf16.mxu0 0
      %310 = vmatpush2.bf16.msra.mxu0 0
      %311 = vmatprep.subr.bf16.mxu0 0
      %312 = vmatpush2.bf16.msra.mxu0 0
      %313 = vmatprep.subr.bf16.mxu0 0
      %314 = vmatpush2.bf16.msra.mxu0 0
      %315 = vmatprep.subr.bf16.mxu0 0
      %316 = vmatpush2.bf16.msra.mxu0 0
      %317 = vmatprep.subr.bf16.mxu0 0
      %318 = vmatpush2.bf16.msra.mxu0 0
      %319 = vmatprep.subr.bf16.mxu0 0
      %320 = vmatpush2.bf16.msra.mxu0 0
      %321 = vmatprep.mubr.bf16.mxu0 0
      %322 = vmatmul.mubr.bf16.gmra.mxu0 %v280
      %v323 = vpop.f32.mrf.mxu0
      %v324 = vadd.f32 %v266, %v323
      %v325 = vpop.f32.mrf.mxu0
      %v326 = vadd.f32 %v266, %v325
      %v327 = vpop.f32.mrf.mxu0
      %v328 = vadd.f32 %v271, %v327
      %v329 = vpop.f32.mrf.mxu0
      %v330 = vadd.f32 %v271, %v329
      %331 = vdwg.mxu0
      %v332 = vmax.f32 %v324, 0.0
      %v333 = vmax.f32 %v326, 0.0
      %v334 = vmax.f32 %v328, 0.0
      %v335 = vmax.f32 %v330, 0.0
      %v336 = vld [vmem:[%s5] sm:$0x3]
      %v337 = vld [vmem:[%s5 + $0x2] sm:$0x3]
      %v338 = vld [vmem:[%s5 + $0x4] sm:$0x3]
      %v339 = vld [vmem:[%s5 + $0x6] sm:$0x3]
      %v340 = vld [vmem:[%s5 + $0x8] sm:$0x3]
      %v341 = vld [vmem:[%s5 + $0xa] sm:$0x3]
      %v342 = vld [vmem:[%s5 + $0xc] sm:$0x3]
      %v343 = vld [vmem:[%s5 + $0xe] sm:$0x3]
      %v344 = vld [vmem:[%s5 + $0x10] sm:$0x3]
      %v345 = vld [vmem:[%s3] sm:$0x3]
      %v346 = vld [vmem:[%s4] sm:$0xf]
      %v347 = vpack.c.bf16 %v332, %v332
      %v348 = vpack.c.bf16 %v333, %v333
      %351 = vrot.lane.b32.xlu0 %v347, 17
      %v352 = vpop.permute.xlu0 %351
      %353 = vrot.lane.b32.xlu0 %v348, 17
      %v354 = vpop.permute.xlu0 %353
      %vm355 = vcmask 138240
      %v356 = vsel %vm355, %v352, %v354
      %vm358 = vcmask 138240
      %v361 = vsel %vm358, 0, %v352
      %v364 = vsel %vm358, %v354, 0
      %v368 = vunpack.c.l.s4 1966171168
      %v369 = vunpack.c.0.s8 %v368
      %v370 = vlaneseq
      %v371 = vshrl.u32 %v370, 7
      %v372 = vsub.s32 %v369, %v371
      %v373 = vrot.slane %v336, %v372
      %v374 = vcombine.high %v373, %v373
      %v376 = vunpack.c.l.s4 1966171168
      %v377 = vunpack.c.0.s8 %v376
      %v378 = vlaneseq
      %v379 = vshrl.u32 %v378, 7
      %v380 = vsub.s32 %v377, %v379
      %v381 = vrot.slane %v373, %v380
      %v383 = vunpack.c.l.s4 1966171168
      %v384 = vunpack.c.0.s8 %v383
      %v385 = vlaneseq
      %v386 = vshrl.u32 %v385, 7
      %v387 = vsub.s32 %v384, %v386
      %v388 = vrot.slane %v374, %v387
      %v390 = vpack.i.b16 %v381, %v381
      %v392 = vlaneseq
      %v393 = vshrl.u32 %v392, 7
      %v394 = vsub.s32 0, %v393
      %v395 = vrot.slane %v390, %v394
      %v397 = vpack.i.b16 %v388, %v388
      %v399 = vlaneseq
      %v400 = vshrl.u32 %v399, 7
      %v401 = vsub.s32 0, %v400
      %v402 = vrot.slane %v397, %v401
      %v403 = vmul.bf16 %v361, %v395
      %v404 = vmul.bf16 %v356, %v402
      %v407 = vunpack.c.l.s4 1966171168
      %v408 = vunpack.c.0.s8 %v407
      %v409 = vlaneseq
      %v410 = vshrl.u32 %v409, 7
      %v411 = vsub.s32 %v408, %v410
      %v412 = vrot.slane %v337, %v411
      %v413 = vcombine.high %v412, %v412
      %v415 = vunpack.c.l.s4 1966171168
      %v416 = vunpack.c.0.s8 %v415
      %v417 = vlaneseq
      %v418 = vshrl.u32 %v417, 7
      %v419 = vsub.s32 %v416, %v418
      %v420 = vrot.slane %v412, %v419
      %v422 = vunpack.c.l.s4 1966171168
      %v423 = vunpack.c.0.s8 %v422
      %v424 = vlaneseq
      %v425 = vshrl.u32 %v424, 7
      %v426 = vsub.s32 %v423, %v425
      %v427 = vrot.slane %v413, %v426
      %v429 = vpack.i.b16 %v420, %v420
      %v431 = vlaneseq
      %v432 = vshrl.u32 %v431, 7
      %v433 = vsub.s32 0, %v432
      %v434 = vrot.slane %v429, %v433
      %v436 = vpack.i.b16 %v427, %v427
      %v438 = vlaneseq
      %v439 = vshrl.u32 %v438, 7
      %v440 = vsub.s32 0, %v439
      %v441 = vrot.slane %v436, %v440
      %444 = vrot.lane.b32.xlu0 %v434, 1
      %v445 = vpop.permute.xlu0 %444
      %446 = vrot.lane.b32.xlu0 %v441, 1
      %v447 = vpop.permute.xlu0 %446
      %vm448 = vcmask 7168
      %v449 = vsel %vm448, %v445, %v447
      %v453 = vmul.bf16 %v361, %v445
      %v454 = vmul.bf16 %v356, %v449
      %v455 = vmul.bf16 %v364, %v447
      %v458 = vunpack.c.l.s4 1966171168
      %v459 = vunpack.c.0.s8 %v458
      %v460 = vlaneseq
      %v461 = vshrl.u32 %v460, 7
      %v462 = vsub.s32 %v459, %v461
      %v463 = vrot.slane %v338, %v462
      %v464 = vcombine.high %v463, %v463
      %v466 = vunpack.c.l.s4 1966171168
      %v467 = vunpack.c.0.s8 %v466
      %v468 = vlaneseq
      %v469 = vshrl.u32 %v468, 7
      %v470 = vsub.s32 %v467, %v469
      %v471 = vrot.slane %v463, %v470
      %v473 = vunpack.c.l.s4 1966171168
      %v474 = vunpack.c.0.s8 %v473
      %v475 = vlaneseq
      %v476 = vshrl.u32 %v475, 7
      %v477 = vsub.s32 %v474, %v476
      %v478 = vrot.slane %v464, %v477
      %v480 = vpack.i.b16 %v471, %v471
      %v482 = vlaneseq
      %v483 = vshrl.u32 %v482, 7
      %v484 = vsub.s32 0, %v483
      %v485 = vrot.slane %v480, %v484
      %v487 = vpack.i.b16 %v478, %v478
      %v489 = vlaneseq
      %v490 = vshrl.u32 %v489, 7
      %v491 = vsub.s32 0, %v490
      %v492 = vrot.slane %v487, %v491
      %495 = vrot.lane.b32.xlu0 %v485, 2
      %v496 = vpop.permute.xlu0 %495
      %497 = vrot.lane.b32.xlu0 %v492, 2
      %v498 = vpop.permute.xlu0 %497
      %vm499 = vcmask 15360
      %v500 = vsel %vm499, %v496, %v498
      %v504 = vmul.bf16 %v361, %v496
      %v505 = vmul.bf16 %v356, %v500
      %v506 = vmul.bf16 %v364, %v498
      %v509 = vunpack.c.l.s4 1966171168
      %v510 = vunpack.c.0.s8 %v509
      %v511 = vlaneseq
      %v512 = vshrl.u32 %v511, 7
      %v513 = vsub.s32 %v510, %v512
      %v514 = vrot.slane %v339, %v513
      %v515 = vcombine.high %v514, %v514
      %v517 = vunpack.c.l.s4 1966171168
      %v518 = vunpack.c.0.s8 %v517
      %v519 = vlaneseq
      %v520 = vshrl.u32 %v519, 7
      %v521 = vsub.s32 %v518, %v520
      %v522 = vrot.slane %v514, %v521
      %v524 = vunpack.c.l.s4 1966171168
      %v525 = vunpack.c.0.s8 %v524
      %v526 = vlaneseq
      %v527 = vshrl.u32 %v526, 7
      %v528 = vsub.s32 %v525, %v527
      %v529 = vrot.slane %v515, %v528
      %v531 = vpack.i.b16 %v522, %v522
      %v533 = vlaneseq
      %v534 = vshrl.u32 %v533, 7
      %v535 = vsub.s32 0, %v534
      %v536 = vrot.slane %v531, %v535
      %v538 = vpack.i.b16 %v529, %v529
      %v540 = vlaneseq
      %v541 = vshrl.u32 %v540, 7
      %v542 = vsub.s32 0, %v541
      %v543 = vrot.slane %v538, %v542
      %546 = vrot.lane.b32.xlu0 %v536, 16
      %v547 = vpop.permute.xlu0 %546
      %548 = vrot.lane.b32.xlu0 %v543, 16
      %v549 = vpop.permute.xlu0 %548
      %vm550 = vcmask 130048
      %v551 = vsel %vm550, %v547, %v549
      %v555 = vmul.bf16 %v361, %v547
      %v556 = vmul.bf16 %v356, %v551
      %v557 = vmul.bf16 %v364, %v549
      %v560 = vunpack.c.l.s4 1966171168
      %v561 = vunpack.c.0.s8 %v560
      %v562 = vlaneseq
      %v563 = vshrl.u32 %v562, 7
      %v564 = vsub.s32 %v561, %v563
      %v565 = vrot.slane %v340, %v564
      %v566 = vcombine.high %v565, %v565
      %v568 = vunpack.c.l.s4 1966171168
      %v569 = vunpack.c.0.s8 %v568
      %v570 = vlaneseq
      %v571 = vshrl.u32 %v570, 7
      %v572 = vsub.s32 %v569, %v571
      %v573 = vrot.slane %v565, %v572
      %v575 = vunpack.c.l.s4 1966171168
      %v576 = vunpack.c.0.s8 %v575
      %v577 = vlaneseq
      %v578 = vshrl.u32 %v577, 7
      %v579 = vsub.s32 %v576, %v578
      %v580 = vrot.slane %v566, %v579
      %v582 = vpack.i.b16 %v573, %v573
      %v584 = vlaneseq
      %v585 = vshrl.u32 %v584, 7
      %v586 = vsub.s32 0, %v585
      %v587 = vrot.slane %v582, %v586
      %v589 = vpack.i.b16 %v580, %v580
      %v591 = vlaneseq
      %v592 = vshrl.u32 %v591, 7
      %v593 = vsub.s32 0, %v592
      %v594 = vrot.slane %v589, %v593
      %597 = vrot.lane.b32.xlu0 %v587, 17
      %v598 = vpop.permute.xlu0 %597
      %599 = vrot.lane.b32.xlu0 %v594, 17
      %v600 = vpop.permute.xlu0 %599
      %v601 = vsel %vm355, %v598, %v600
      %v605 = vmul.bf16 %v361, %v598
      %v606 = vmul.bf16 %v356, %v601
      %v607 = vmul.bf16 %v364, %v600
      %v610 = vunpack.c.l.s4 1966171168
      %v611 = vunpack.c.0.s8 %v610
      %v612 = vlaneseq
      %v613 = vshrl.u32 %v612, 7
      %v614 = vsub.s32 %v611, %v613
      %v615 = vrot.slane %v341, %v614
      %v616 = vcombine.high %v615, %v615
      %v618 = vunpack.c.l.s4 1966171168
      %v619 = vunpack.c.0.s8 %v618
      %v620 = vlaneseq
      %v621 = vshrl.u32 %v620, 7
      %v622 = vsub.s32 %v619, %v621
      %v623 = vrot.slane %v615, %v622
      %v625 = vunpack.c.l.s4 1966171168
      %v626 = vunpack.c.0.s8 %v625
      %v627 = vlaneseq
      %v628 = vshrl.u32 %v627, 7
      %v629 = vsub.s32 %v626, %v628
      %v630 = vrot.slane %v616, %v629
      %v632 = vpack.i.b16 %v623, %v623
      %v634 = vlaneseq
      %v635 = vshrl.u32 %v634, 7
      %v636 = vsub.s32 0, %v635
      %v637 = vrot.slane %v632, %v636
      %v639 = vpack.i.b16 %v630, %v630
      %v641 = vlaneseq
      %v642 = vshrl.u32 %v641, 7
      %v643 = vsub.s32 0, %v642
      %v644 = vrot.slane %v639, %v643
      %647 = vrot.lane.b32.xlu0 %v637, 18
      %v648 = vpop.permute.xlu0 %647
      %649 = vrot.lane.b32.xlu0 %v644, 18
      %v650 = vpop.permute.xlu0 %649
      %vm651 = vcmask 146432
      %v652 = vsel %vm651, %v648, %v650
      %v656 = vmul.bf16 %v361, %v648
      %v657 = vmul.bf16 %v356, %v652
      %v658 = vmul.bf16 %v364, %v650
      %v661 = vunpack.c.l.s4 1966171168
      %v662 = vunpack.c.0.s8 %v661
      %v663 = vlaneseq
      %v664 = vshrl.u32 %v663, 7
      %v665 = vsub.s32 %v662, %v664
      %v666 = vrot.slane %v342, %v665
      %v667 = vcombine.high %v666, %v666
      %v669 = vunpack.c.l.s4 1966171168
      %v670 = vunpack.c.0.s8 %v669
      %v671 = vlaneseq
      %v672 = vshrl.u32 %v671, 7
      %v673 = vsub.s32 %v670, %v672
      %v674 = vrot.slane %v666, %v673
      %v676 = vunpack.c.l.s4 1966171168
      %v677 = vunpack.c.0.s8 %v676
      %v678 = vlaneseq
      %v679 = vshrl.u32 %v678, 7
      %v680 = vsub.s32 %v677, %v679
      %v681 = vrot.slane %v667, %v680
      %v683 = vpack.i.b16 %v674, %v674
      %v685 = vlaneseq
      %v686 = vshrl.u32 %v685, 7
      %v687 = vsub.s32 0, %v686
      %v688 = vrot.slane %v683, %v687
      %v690 = vpack.i.b16 %v681, %v681
      %v692 = vlaneseq
      %v693 = vshrl.u32 %v692, 7
      %v694 = vsub.s32 0, %v693
      %v695 = vrot.slane %v690, %v694
      %698 = vrot.lane.b32.xlu0 %v688, 32
      %v699 = vpop.permute.xlu0 %698
      %700 = vrot.lane.b32.xlu0 %v695, 32
      %v701 = vpop.permute.xlu0 %700
      %vm702 = vcmask 261120
      %v703 = vsel %vm702, %v699, %v701
      %v707 = vmul.bf16 %v361, %v699
      %v708 = vmul.bf16 %v356, %v703
      %v709 = vmul.bf16 %v364, %v701
      %v712 = vunpack.c.l.s4 1966171168
      %v713 = vunpack.c.0.s8 %v712
      %v714 = vlaneseq
      %v715 = vshrl.u32 %v714, 7
      %v716 = vsub.s32 %v713, %v715
      %v717 = vrot.slane %v343, %v716
      %v718 = vcombine.high %v717, %v717
      %v720 = vunpack.c.l.s4 1966171168
      %v721 = vunpack.c.0.s8 %v720
      %v722 = vlaneseq
      %v723 = vshrl.u32 %v722, 7
      %v724 = vsub.s32 %v721, %v723
      %v725 = vrot.slane %v717, %v724
      %v727 = vunpack.c.l.s4 1966171168
      %v728 = vunpack.c.0.s8 %v727
      %v729 = vlaneseq
      %v730 = vshrl.u32 %v729, 7
      %v731 = vsub.s32 %v728, %v730
      %v732 = vrot.slane %v718, %v731
      %v734 = vpack.i.b16 %v725, %v725
      %v736 = vlaneseq
      %v737 = vshrl.u32 %v736, 7
      %v738 = vsub.s32 0, %v737
      %v739 = vrot.slane %v734, %v738
      %v741 = vpack.i.b16 %v732, %v732
      %v743 = vlaneseq
      %v744 = vshrl.u32 %v743, 7
      %v745 = vsub.s32 0, %v744
      %v746 = vrot.slane %v741, %v745
      %749 = vrot.lane.b32.xlu0 %v739, 33
      %v750 = vpop.permute.xlu0 %749
      %751 = vrot.lane.b32.xlu0 %v746, 33
      %v752 = vpop.permute.xlu0 %751
      %vm753 = vcmask 269312
      %v754 = vsel %vm753, %v750, %v752
      %v758 = vmul.bf16 %v361, %v750
      %v759 = vmul.bf16 %v356, %v754
      %v760 = vmul.bf16 %v364, %v752
      %v763 = vunpack.c.l.s4 1966171168
      %v764 = vunpack.c.0.s8 %v763
      %v765 = vlaneseq
      %v766 = vshrl.u32 %v765, 7
      %v767 = vsub.s32 %v764, %v766
      %v768 = vrot.slane %v344, %v767
      %v769 = vcombine.high %v768, %v768
      %v771 = vunpack.c.l.s4 1966171168
      %v772 = vunpack.c.0.s8 %v771
      %v773 = vlaneseq
      %v774 = vshrl.u32 %v773, 7
      %v775 = vsub.s32 %v772, %v774
      %v776 = vrot.slane %v768, %v775
      %v778 = vunpack.c.l.s4 1966171168
      %v779 = vunpack.c.0.s8 %v778
      %v780 = vlaneseq
      %v781 = vshrl.u32 %v780, 7
      %v782 = vsub.s32 %v779, %v781
      %v783 = vrot.slane %v769, %v782
      %v785 = vpack.i.b16 %v776, %v776
      %v787 = vlaneseq
      %v788 = vshrl.u32 %v787, 7
      %v789 = vsub.s32 0, %v788
      %v790 = vrot.slane %v785, %v789
      %v792 = vpack.i.b16 %v783, %v783
      %v794 = vlaneseq
      %v795 = vshrl.u32 %v794, 7
      %v796 = vsub.s32 0, %v795
      %v797 = vrot.slane %v792, %v796
      %800 = vrot.lane.b32.xlu0 %v790, 34
      %v801 = vpop.permute.xlu0 %800
      %802 = vrot.lane.b32.xlu0 %v797, 34
      %v803 = vpop.permute.xlu0 %802
      %vm804 = vcmask 277504
      %v805 = vsel %vm804, %v801, %v803
      %v809 = vmul.bf16 %v361, %v801
      %v810 = vmul.bf16 %v356, %v805
      %v811 = vmul.bf16 %v364, %v803
      %v815 = vrot.slane %v453, 6
      %v816 = vrot.slane %v454, 6
      %v817 = vrot.slane %v455, 6
      %818 = vrot.lane.b32.xlu0 %v815, 127
      %v819 = vpop.permute.xlu0 %818
      %820 = vrot.lane.b32.xlu0 %v816, 127
      %v821 = vpop.permute.xlu0 %820
      %822 = vrot.lane.b32.xlu0 %v817, 127
      %v823 = vpop.permute.xlu0 %822
      %vm824 = vcmask 1039360
      %v825 = vsel %vm824, %v819, %v821
      %v826 = vsel %vm824, %v821, %v823
      %v830 = vrot.slane %v504, 4
      %v831 = vrot.slane %v505, 4
      %v832 = vrot.slane %v506, 4
      %833 = vrot.lane.b32.xlu0 %v830, 126
      %v834 = vpop.permute.xlu0 %833
      %835 = vrot.lane.b32.xlu0 %v831, 126
      %v836 = vpop.permute.xlu0 %835
      %837 = vrot.lane.b32.xlu0 %v832, 126
      %v838 = vpop.permute.xlu0 %837
      %vm839 = vcmask 1031168
      %v840 = vsel %vm839, %v834, %v836
      %v841 = vsel %vm839, %v836, %v838
      %v845 = vrot.slane %v555, 2
      %v846 = vrot.slane %v556, 2
      %v847 = vrot.slane %v557, 2
      %848 = vrot.lane.b32.xlu0 %v845, 112
      %v849 = vpop.permute.xlu0 %848
      %850 = vrot.lane.b32.xlu0 %v846, 112
      %v851 = vpop.permute.xlu0 %850
      %852 = vrot.lane.b32.xlu0 %v847, 112
      %v853 = vpop.permute.xlu0 %852
      %vm854 = vcmask 916480
      %v855 = vsel %vm854, %v849, %v851
      %v856 = vsel %vm854, %v851, %v853
      %860 = vrot.lane.b32.xlu0 %v605, 111
      %v861 = vpop.permute.xlu0 %860
      %862 = vrot.lane.b32.xlu0 %v606, 111
      %v863 = vpop.permute.xlu0 %862
      %864 = vrot.lane.b32.xlu0 %v607, 111
      %v865 = vpop.permute.xlu0 %864
      %vm866 = vcmask 908288
      %v867 = vsel %vm866, %v861, %v863
      %v868 = vsel %vm866, %v863, %v865
      %v872 = vrot.slane %v656, 6
      %v873 = vrot.slane %v657, 6
      %v874 = vrot.slane %v658, 6
      %875 = vrot.lane.b32.xlu0 %v872, 110
      %v876 = vpop.permute.xlu0 %875
      %877 = vrot.lane.b32.xlu0 %v873, 110
      %v878 = vpop.permute.xlu0 %877
      %879 = vrot.lane.b32.xlu0 %v874, 110
      %v880 = vpop.permute.xlu0 %879
      %vm881 = vcmask 900096
      %v882 = vsel %vm881, %v876, %v878
      %v883 = vsel %vm881, %v878, %v880
      %v887 = vrot.slane %v707, 4
      %v888 = vrot.slane %v708, 4
      %v889 = vrot.slane %v709, 4
      %890 = vrot.lane.b32.xlu0 %v887, 96
      %v891 = vpop.permute.xlu0 %890
      %892 = vrot.lane.b32.xlu0 %v888, 96
      %v893 = vpop.permute.xlu0 %892
      %894 = vrot.lane.b32.xlu0 %v889, 96
      %v895 = vpop.permute.xlu0 %894
      %vm896 = vcmask 785408
      %v897 = vsel %vm896, %v891, %v893
      %v898 = vsel %vm896, %v893, %v895
      %v902 = vrot.slane %v758, 2
      %v903 = vrot.slane %v759, 2
      %v904 = vrot.slane %v760, 2
      %905 = vrot.lane.b32.xlu0 %v902, 95
      %v906 = vpop.permute.xlu0 %905
      %907 = vrot.lane.b32.xlu0 %v903, 95
      %v908 = vpop.permute.xlu0 %907
      %909 = vrot.lane.b32.xlu0 %v904, 95
      %v910 = vpop.permute.xlu0 %909
      %vm911 = vcmask 777216
      %v912 = vsel %vm911, %v906, %v908
      %v913 = vsel %vm911, %v908, %v910
      %917 = vrot.lane.b32.xlu0 %v809, 94
      %v918 = vpop.permute.xlu0 %917
      %919 = vrot.lane.b32.xlu0 %v810, 94
      %v920 = vpop.permute.xlu0 %919
      %921 = vrot.lane.b32.xlu0 %v811, 94
      %v922 = vpop.permute.xlu0 %921
      %vm923 = vcmask 769024
      %v924 = vsel %vm923, %v918, %v920
      %v925 = vsel %vm923, %v920, %v922
      %v928 = vsel %vm282, %v403, %v825
      %v931 = vsel %vm282, %v404, %v826
      %vm932 = vcmask 1043456
      %v934 = vsel %vm932, %v928, %v840
      %v936 = vsel %vm932, %v931, %v841
      %vm937 = vcmask 1045504
      %v939 = vsel %vm937, %v934, %v855
      %v942 = vsel %vm937, %v936, %v856
      %v946 = vsel %vm282, %v867, %v882
      %v949 = vsel %vm282, %v868, %v883
      %v951 = vsel %vm932, %v946, %v897
      %v953 = vsel %vm932, %v949, %v898
      %v955 = vsel %vm937, %v951, %v912
      %v958 = vsel %vm937, %v953, %v913
      %961 = vset.pattern.permute.xlu0 0
      %962 = vperm.xlu0 %961, %v346
      %v963 = vpop.permute.xlu0 %962
      %vm965 = vcmask 293888
      %v967 = vsel %vm965, %v345, 0
      %v970 = vsel %vm282, %v924, 0
      %v973 = vsel %vm282, %v925, 0
      %975 = vmatprep.subr.bf16.mxu0 0
      %976 = vmatpush1.bf16.msra.mxu0 0
      %977 = vmatprep.subr.bf16.mxu0 0
      %978 = vmatpush1.bf16.msra.mxu0 0
      %979 = vmatprep.subr.bf16.mxu0 0
      %980 = vmatpush1.bf16.msra.mxu0 0
      %981 = vmatprep.subr.bf16.mxu0 0
      %982 = vmatpush1.bf16.msra.mxu0 0
      %983 = vmatprep.subr.bf16.mxu0 0
      %984 = vmatpush1.bf16.msra.mxu0 0
      %985 = vmatprep.subr.bf16.mxu0 %v973
      %986 = vmatpush1.bf16.msra.mxu0 %v970
      %987 = vmatprep.subr.bf16.mxu0 %v958
      %988 = vmatpush1.bf16.msra.mxu0 %v955
      %989 = vmatprep.subr.bf16.mxu0 %v942
      %990 = vmatpush1.bf16.msra.mxu0 %v939
      %991 = vmatprep.subr.bf16.mxu0 0
      %992 = vmatpush2.bf16.msra.mxu0 0
      %993 = vmatprep.subr.bf16.mxu0 0
      %994 = vmatpush2.bf16.msra.mxu0 0
      %995 = vmatprep.subr.bf16.mxu0 0
      %996 = vmatpush2.bf16.msra.mxu0 0
      %997 = vmatprep.subr.bf16.mxu0 0
      %998 = vmatpush2.bf16.msra.mxu0 0
      %999 = vmatprep.subr.bf16.mxu0 0
      %1000 = vmatpush2.bf16.msra.mxu0 0
      %1001 = vmatprep.subr.bf16.mxu0 0
      %1002 = vmatpush2.bf16.msra.mxu0 0
      %1003 = vmatprep.subr.bf16.mxu0 0
      %1004 = vmatpush2.bf16.msra.mxu0 0
      %1005 = vmatprep.subr.bf16.mxu0 0
      %1006 = vmatpush2.bf16.msra.mxu0 0
      %1007 = vmatprep.mubr.bf16.mxu0 0
      %1008 = vmatmul.mubr.bf16.gmra.mxu0 %v967
      %v1009 = vpop.f32.mrf.mxu0
      %v1010 = vadd.f32 %v963, %v1009
      %v1011 = vpop.f32.mrf.mxu0
      %v1012 = vadd.f32 %v963, %v1011
      %v1013 = vpop.f32.mrf.mxu0
      %v1014 = vpop.f32.mrf.mxu0
      %1015 = vdwg.mxu0
      %v1016 = vmax.f32 %v1010, 0.0
      %v1017 = vmax.f32 %v1012, 0.0
      %v1020 = vrot.slane %v332, 4
      %v1021 = vrot.slane %v333, 4
      %v1024 = vadd.f32 %v1016, %v1020
      %v1025 = vadd.f32 %v1017, %v1021
      %s1026 = scalar_lea.vmem %s3, 2
      %v1027 = vld [vmem:[%s1026] sm:$0x3]
      %s1028 = scalar_lea.vmem %s4, 4
      %v1029 = vld [vmem:[%s1028] sm:$0xf]
      %v1030 = vpack.c.bf16 %v1024, %v1024
      %v1031 = vpack.c.bf16 %v1025, %v1025
      %1034 = vrot.lane.b32.xlu0 %v1030, 17
      %v1035 = vpop.permute.xlu0 %1034
      %1036 = vrot.lane.b32.xlu0 %v1031, 17
      %v1037 = vpop.permute.xlu0 %1036
      %v1038 = vsel %vm355, %v1035, %v1037
      %v1041 = vsel %vm358, 0, %v1035
      %v1044 = vsel %vm358, %v1037, 0
      %v1046 = vmul.bf16 %v1041, %v395
      %v1047 = vmul.bf16 %v1038, %v402
      %v1048 = vmul.bf16 %v1041, %v445
      %v1049 = vmul.bf16 %v1038, %v449
      %v1050 = vmul.bf16 %v1044, %v447
      %v1051 = vmul.bf16 %v1041, %v496
      %v1052 = vmul.bf16 %v1038, %v500
      %v1053 = vmul.bf16 %v1044, %v498
      %v1054 = vmul.bf16 %v1041, %v547
      %v1055 = vmul.bf16 %v1038, %v551
      %v1056 = vmul.bf16 %v1044, %v549
      %v1057 = vmul.bf16 %v1041, %v598
      %v1058 = vmul.bf16 %v1038, %v601
      %v1059 = vmul.bf16 %v1044, %v600
      %v1060 = vmul.bf16 %v1041, %v648
      %v1061 = vmul.bf16 %v1038, %v652
      %v1062 = vmul.bf16 %v1044, %v650
      %v1063 = vmul.bf16 %v1041, %v699
      %v1064 = vmul.bf16 %v1038, %v703
      %v1065 = vmul.bf16 %v1044, %v701
      %v1066 = vmul.bf16 %v1041, %v750
      %v1067 = vmul.bf16 %v1038, %v754
      %v1068 = vmul.bf16 %v1044, %v752
      %v1069 = vmul.bf16 %v1041, %v801
      %v1070 = vmul.bf16 %v1038, %v805
      %v1071 = vmul.bf16 %v1044, %v803
      %v1075 = vrot.slane %v1048, 6
      %v1076 = vrot.slane %v1049, 6
      %v1077 = vrot.slane %v1050, 6
      %1078 = vrot.lane.b32.xlu0 %v1075, 127
      %v1079 = vpop.permute.xlu0 %1078
      %1080 = vrot.lane.b32.xlu0 %v1076, 127
      %v1081 = vpop.permute.xlu0 %1080
      %1082 = vrot.lane.b32.xlu0 %v1077, 127
      %v1083 = vpop.permute.xlu0 %1082
      %v1084 = vsel %vm824, %v1079, %v1081
      %v1085 = vsel %vm824, %v1081, %v1083
      %v1089 = vrot.slane %v1051, 4
      %v1090 = vrot.slane %v1052, 4
      %v1091 = vrot.slane %v1053, 4
      %1092 = vrot.lane.b32.xlu0 %v1089, 126
      %v1093 = vpop.permute.xlu0 %1092
      %1094 = vrot.lane.b32.xlu0 %v1090, 126
      %v1095 = vpop.permute.xlu0 %1094
      %1096 = vrot.lane.b32.xlu0 %v1091, 126
      %v1097 = vpop.permute.xlu0 %1096
      %v1098 = vsel %vm839, %v1093, %v1095
      %v1099 = vsel %vm839, %v1095, %v1097
      %v1103 = vrot.slane %v1054, 2
      %v1104 = vrot.slane %v1055, 2
      %v1105 = vrot.slane %v1056, 2
      %1106 = vrot.lane.b32.xlu0 %v1103, 112
      %v1107 = vpop.permute.xlu0 %1106
      %1108 = vrot.lane.b32.xlu0 %v1104, 112
      %v1109 = vpop.permute.xlu0 %1108
      %1110 = vrot.lane.b32.xlu0 %v1105, 112
      %v1111 = vpop.permute.xlu0 %1110
      %v1112 = vsel %vm854, %v1107, %v1109
      %v1113 = vsel %vm854, %v1109, %v1111
      %1117 = vrot.lane.b32.xlu0 %v1057, 111
      %v1118 = vpop.permute.xlu0 %1117
      %1119 = vrot.lane.b32.xlu0 %v1058, 111
      %v1120 = vpop.permute.xlu0 %1119
      %1121 = vrot.lane.b32.xlu0 %v1059, 111
      %v1122 = vpop.permute.xlu0 %1121
      %v1123 = vsel %vm866, %v1118, %v1120
      %v1124 = vsel %vm866, %v1120, %v1122
      %v1128 = vrot.slane %v1060, 6
      %v1129 = vrot.slane %v1061, 6
      %v1130 = vrot.slane %v1062, 6
      %1131 = vrot.lane.b32.xlu0 %v1128, 110
      %v1132 = vpop.permute.xlu0 %1131
      %1133 = vrot.lane.b32.xlu0 %v1129, 110
      %v1134 = vpop.permute.xlu0 %1133
      %1135 = vrot.lane.b32.xlu0 %v1130, 110
      %v1136 = vpop.permute.xlu0 %1135
      %v1137 = vsel %vm881, %v1132, %v1134
      %v1138 = vsel %vm881, %v1134, %v1136
      %v1142 = vrot.slane %v1063, 4
      %v1143 = vrot.slane %v1064, 4
      %v1144 = vrot.slane %v1065, 4
      %1145 = vrot.lane.b32.xlu0 %v1142, 96
      %v1146 = vpop.permute.xlu0 %1145
      %1147 = vrot.lane.b32.xlu0 %v1143, 96
      %v1148 = vpop.permute.xlu0 %1147
      %1149 = vrot.lane.b32.xlu0 %v1144, 96
      %v1150 = vpop.permute.xlu0 %1149
      %v1151 = vsel %vm896, %v1146, %v1148
      %v1152 = vsel %vm896, %v1148, %v1150
      %v1156 = vrot.slane %v1066, 2
      %v1157 = vrot.slane %v1067, 2
      %v1158 = vrot.slane %v1068, 2
      %1159 = vrot.lane.b32.xlu0 %v1156, 95
      %v1160 = vpop.permute.xlu0 %1159
      %1161 = vrot.lane.b32.xlu0 %v1157, 95
      %v1162 = vpop.permute.xlu0 %1161
      %1163 = vrot.lane.b32.xlu0 %v1158, 95
      %v1164 = vpop.permute.xlu0 %1163
      %v1165 = vsel %vm911, %v1160, %v1162
      %v1166 = vsel %vm911, %v1162, %v1164
      %1170 = vrot.lane.b32.xlu0 %v1069, 94
      %v1171 = vpop.permute.xlu0 %1170
      %1172 = vrot.lane.b32.xlu0 %v1070, 94
      %v1173 = vpop.permute.xlu0 %1172
      %1174 = vrot.lane.b32.xlu0 %v1071, 94
      %v1175 = vpop.permute.xlu0 %1174
      %v1176 = vsel %vm923, %v1171, %v1173
      %v1177 = vsel %vm923, %v1173, %v1175
      %v1180 = vsel %vm282, %v1046, %v1084
      %v1183 = vsel %vm282, %v1047, %v1085
      %v1185 = vsel %vm932, %v1180, %v1098
      %v1187 = vsel %vm932, %v1183, %v1099
      %v1189 = vsel %vm937, %v1185, %v1112
      %v1192 = vsel %vm937, %v1187, %v1113
      %v1196 = vsel %vm282, %v1123, %v1137
      %v1199 = vsel %vm282, %v1124, %v1138
      %v1201 = vsel %vm932, %v1196, %v1151
      %v1203 = vsel %vm932, %v1199, %v1152
      %v1205 = vsel %vm937, %v1201, %v1165
      %v1208 = vsel %vm937, %v1203, %v1166
      %1211 = vset.pattern.permute.xlu0 0
      %1212 = vperm.xlu0 %1211, %v1029
      %v1213 = vpop.permute.xlu0 %1212
      %v1216 = vsel %vm965, %v1027, 0
      %v1219 = vsel %vm282, %v1176, 0
      %v1222 = vsel %vm282, %v1177, 0
      %1224 = vmatprep.subr.bf16.mxu0 0
      %1225 = vmatpush1.bf16.msra.mxu0 0
      %1226 = vmatprep.subr.bf16.mxu0 0
      %1227 = vmatpush1.bf16.msra.mxu0 0
      %1228 = vmatprep.subr.bf16.mxu0 0
      %1229 = vmatpush1.bf16.msra.mxu0 0
      %1230 = vmatprep.subr.bf16.mxu0 0
      %1231 = vmatpush1.bf16.msra.mxu0 0
      %1232 = vmatprep.subr.bf16.mxu0 0
      %1233 = vmatpush1.bf16.msra.mxu0 0
      %1234 = vmatprep.subr.bf16.mxu0 %v1222
      %1235 = vmatpush1.bf16.msra.mxu0 %v1219
      %1236 = vmatprep.subr.bf16.mxu0 %v1208
      %1237 = vmatpush1.bf16.msra.mxu0 %v1205
      %1238 = vmatprep.subr.bf16.mxu0 %v1192
      %1239 = vmatpush1.bf16.msra.mxu0 %v1189
      %1240 = vmatprep.subr.bf16.mxu0 0
      %1241 = vmatpush2.bf16.msra.mxu0 0
      %1242 = vmatprep.subr.bf16.mxu0 0
      %1243 = vmatpush2.bf16.msra.mxu0 0
      %1244 = vmatprep.subr.bf16.mxu0 0
      %1245 = vmatpush2.bf16.msra.mxu0 0
      %1246 = vmatprep.subr.bf16.mxu0 0
      %1247 = vmatpush2.bf16.msra.mxu0 0
      %1248 = vmatprep.subr.bf16.mxu0 0
      %1249 = vmatpush2.bf16.msra.mxu0 0
      %1250 = vmatprep.subr.bf16.mxu0 0
      %1251 = vmatpush2.bf16.msra.mxu0 0
      %1252 = vmatprep.subr.bf16.mxu0 0
      %1253 = vmatpush2.bf16.msra.mxu0 0
      %1254 = vmatprep.subr.bf16.mxu0 0
      %1255 = vmatpush2.bf16.msra.mxu0 0
      %1256 = vmatprep.mubr.bf16.mxu0 0
      %1257 = vmatmul.mubr.bf16.gmra.mxu0 %v1216
      %v1258 = vpop.f32.mrf.mxu0
      %v1259 = vadd.f32 %v1213, %v1258
      %v1260 = vpop.f32.mrf.mxu0
      %v1261 = vadd.f32 %v1213, %v1260
      %v1262 = vpop.f32.mrf.mxu0
      %v1263 = vpop.f32.mrf.mxu0
      %1264 = vdwg.mxu0
      %v1265 = vmax.f32 %v1259, 0.0
      %v1266 = vmax.f32 %v1261, 0.0
      %v1269 = vrot.slane %v1265, 4
      %v1270 = vrot.slane %v1266, 4
      %v1273 = vsel %vm932, %v1016, %v1269
      %v1274 = vsel %vm932, %v1017, %v1270
      %v1275 = vsel %vm932, %v253, 0.0
      %v1276 = vrot.slane %v1275, 4
      %v1277 = vadd.f32 %v1275, %v1276
      %v1278 = vrot.slane %v1277, 2
      %v1279 = vadd.f32 %v1277, %v1278
      %v1280 = vrot.slane %v1279, 1
      %v1281 = vadd.f32 %v1279, %v1280
      %v1282 = vsel %vm932, %v257, 0.0
      %v1283 = vrot.slane %v1282, 4
      %v1284 = vadd.f32 %v1282, %v1283
      %v1285 = vrot.slane %v1284, 2
      %v1286 = vadd.f32 %v1284, %v1285
      %v1287 = vrot.slane %v1286, 1
      %v1288 = vadd.f32 %v1286, %v1287
      %v1289 = vrcp.pop 4.0
      %v1290 = vmul.f32 %v1281, %v1289
      %v1291 = vmul.f32 %v1288, %v1289
      %v1292 = vxor.u32 %v1290, 2147483648
      %v1293 = vxor.u32 %v1291, 2147483648
      %v1294 = vmul.f32 %v1292, 1.442695
      %v1295 = vpow.pop %v1294
      %v1296 = vmul.f32 %v1293, 1.442695
      %v1297 = vpow.pop %v1296
      %v1298 = vadd.f32 %v1295, 1.0
      %v1299 = vadd.f32 %v1297, 1.0
      %v1300 = vrcp.pop %v1298
      %v1301 = vmul.f32 1.0, %v1300
      %v1302 = vrcp.pop %v1299
      %v1303 = vmul.f32 1.0, %v1302
      %v1304 = vmul.f32 %v1273, %v1301
      %v1305 = vmul.f32 %v1274, %v1303
      %v1306 = vmul.f32 %v334, %v1301
      %v1307 = vmul.f32 %v335, %v1303
      %1308 = vst [vmem:[%s251] sm:$0xff] %v1304
      %1309 = vst [vmem:[%s251 + $0x8] sm:$0xff] %v1305
      %1310 = vst [vmem:[%s251 + $0x10] sm:$0xf] %v1306
      %1311 = vst [vmem:[%s251 + $0x18] sm:$0xf] %v1307
      %p1312 = scmp.lt.s32.totalorder %s17, 1
      %s1313 = scalar_select %p1312, %s17, 1
      %s1314 = smul.addr %s1313, 4
      %s1315 = smul.addr %s1314, 8
      %s1316 = scalar_lea.vmem %s6, %s1315
      // Predicated region
      $region45: #{tpu_custom_call.1} parent=43 // pred_check
        %p1317 = pneg %p166
      $region46: #{tpu_custom_call.1} parent=43 // pred_check_branch
        %1319 = sbr.rel (%p1317) target = $region48
      $region47: #{tpu_custom_call.1} parent=43 // pred_region
        _
      $region48: #{tpu_custom_call.1} parent=43 // pred_fallthru
        _
    $region44: #{tpu_custom_call.1} parent=5 // pred_fallthru
      _
    %p1320 = scmp.le.s32.totalorder 2, %s12
    // Predicated region
    $region49: #{tpu_custom_call.1} parent=5 // pred_check
      %p1321 = pneg %p1320
    $region50: #{tpu_custom_call.1} parent=5 // pred_check_branch
      %1323 = sbr.rel (%p1321) target = $region52
    $region51: #{tpu_custom_call.1} parent=5 // pred_region
      %s1324 = ssub.s32 %s12, 2
      // Predicated region
      $region53: #{tpu_custom_call.1} parent=51 // pred_check
        %p1325 = pneg %p172
      $region54: #{tpu_custom_call.1} parent=51 // pred_check_branch
        %1327 = sbr.rel (%p1325) target = $region56
      $region55: #{tpu_custom_call.1} parent=51 // pred_region
        %p1328 = scmp.lt.s32.totalorder %s18, 1
        %s1329 = scalar_select %p1328, %s18, 1
        %s1330 = smul.addr %s1329, 4
        %s1331 = smul.addr %s1330, 8
        %s1332 = scalar_lea.vmem %s6, %s1331
      $region56: #{tpu_custom_call.1} parent=51 // pred_fallthru
        _
    $region52: #{tpu_custom_call.1} parent=5 // pred_fallthru
      _
  $region6: #{tpu_custom_call.1} parent=0 // loop_footer
    %s16 = sadd.s32 1, %s12
  $region7: #{tpu_custom_call.1} parent=0 // loop_footer_branch
    %11 = sbr.rel target = $region3
  $region8: #{tpu_custom_call.1} parent=0 // loop_exit
    _

</llo_original>
